<compile_context>
chip_gen: v5e
topology: v5e:2x2
jax: 0.10.0
libtpu: 0.0.40
codegen_flags: <defaults>
</compile_context>

<pallas_src>
import jax
import jax.numpy as jnp
import numpy as np
from jax.experimental import pallas as pl
from jax.experimental.pallas import tpu as pltpu

# ----- hyperparameters (small, consistent with the module's __init__) -----
IN_FEATS  = 16
HIDDEN    = 32
OUT_FEATS = 8
NUM_HOPS  = 3
NUM_HEADS = 2
N_NODES   = 512            # batched; amortizes per-call / per-step overhead
TILE_N    = 128            # rows per grid step
HH        = HIDDEN * NUM_HEADS
KIN       = NUM_HOPS * IN_FEATS      # 48
KH        = NUM_HOPS * HIDDEN        # 96
CONTRACT  = KH + HIDDEN              # 128 (hop-hiddens + residual lanes)
BN_EPS    = 1e-5


# ----------------------------- Pallas kernel ------------------------------
def sagn_kernel(xcat_ref, w0_ref, w2_ref, wm0_ref, wm1_ref, bias_ref, o_ref):
    """One TILE_N row-block per grid step; all weights VMEM-resident.

    bias_ref rows: 0 -> first-layer bias (128 lanes, residual lanes zero),
                   1 -> second-layer bias with final-BN fold (first 32 lanes),
                   2 -> output-MLP layer-0 bias with its BN fold (first 32),
                   3 -> output-MLP layer-1 bias (first 8 lanes).
    """
    x = xcat_ref[...]                                           # (TILE_N, 48)

    # Block-diag per-hop first layers + residual columns in one (48,128) matmul.
    h = jnp.dot(x, w0_ref[...], preferred_element_type=jnp.float32)
    h = h + bias_ref[0:1, :]
    # ReLU only on the per-hop hidden lanes; residual lanes (96..127) pass through.
    lane = jax.lax.broadcasted_iota(jnp.int32, h.shape, 1)
    h = jnp.where(lane < KH, jnp.maximum(h, 0.0), h)

    # Hop-sum + head-mean + residual add + final BN fold, all in one (128,32) matmul.
    z = jnp.dot(h, w2_ref[...], preferred_element_type=jnp.float32)
    z = jnp.maximum(z + bias_ref[1:2, :HIDDEN], 0.0)

    # Output MLP: Linear -> BN(folded) -> ReLU -> Linear   (dropout = identity, eval)
    z = jnp.dot(z, wm0_ref[...], preferred_element_type=jnp.float32)
    z = jnp.maximum(z + bias_ref[2:3, :HIDDEN], 0.0)
    z = jnp.dot(z, wm1_ref[...], preferred_element_type=jnp.float32)
    z = z + bias_ref[3:4, :OUT_FEATS]

    o_ref[...] = z.astype(o_ref.dtype)


def simple_sagn_pallas(x_cat, w0_ext, w2, wm0, wm1, bias_slab, *, tile_n=TILE_N):
    n, kin = x_cat.shape
    assert n % tile_n == 0
    fixed = lambda i: (0, 0)   # weights: same block every step (stay resident)
    return pl.pallas_call(
        sagn_kernel,
        out_shape=jax.ShapeDtypeStruct((n, OUT_FEATS), jnp.float32),
        grid=(n // tile_n,),
        in_specs=[
            pl.BlockSpec((tile_n, kin), lambda i: (i, 0)),
            pl.BlockSpec(w0_ext.shape, fixed),
            pl.BlockSpec(w2.shape, fixed),
            pl.BlockSpec(wm0.shape, fixed),
            pl.BlockSpec(wm1.shape, fixed),
            pl.BlockSpec(bias_slab.shape, fixed),
        ],
        out_specs=pl.BlockSpec((tile_n, OUT_FEATS), lambda i: (i, 0)),
        compiler_params=pltpu.CompilerParams(
            dimension_semantics=("parallel",)),     # shards across TCs on v7x
    )(x_cat, w0_ext, w2, wm0, wm1, bias_slab)


# ------------------------ parameter init (deterministic) ------------------------
def xavier_uniform(key, shape, gain):
    fan_in, fan_out = shape
    a = gain * np.sqrt(6.0 / (fan_in + fan_out))
    return jax.random.uniform(key, shape, jnp.float32, -a, a)


def xavier_normal(key, shape, gain):
    fan_in, fan_out = shape
    std = gain * np.sqrt(2.0 / (fan_in + fan_out))
    return std * jax.random.normal(key, shape, jnp.float32)


def make_params(key):
    gain = float(np.sqrt(2.0))  # calculate_gain('relu')
    keys = jax.random.split(key, 2 * NUM_HOPS + 4)
    p = {}
    # per-hop MLPs (in -> hidden -> hidden*heads), biases init to zero
    p["W0"] = jnp.stack([xavier_uniform(keys[2 * i], (IN_FEATS, HIDDEN), gain)
                         for i in range(NUM_HOPS)])                       # [K, IN, H]
    p["b0"] = jnp.zeros((NUM_HOPS, HIDDEN), jnp.float32)
    p["W1"] = jnp.stack([xavier_uniform(keys[2 * i + 1], (HIDDEN, HH), gain)
                         for i in range(NUM_HOPS)])                       # [K, H, HH]
    p["b1"] = jnp.zeros((NUM_HOPS, HH), jnp.float32)
    # residual fc
    p["Wres"] = xavier_normal(keys[2 * NUM_HOPS], (IN_FEATS, HH), gain)   # [IN, HH]
    # output MLP (hidden -> hidden -> out)
    p["Wm0"] = xavier_uniform(keys[2 * NUM_HOPS + 1], (HIDDEN, HIDDEN), gain)
    p["bm0"] = jnp.zeros((HIDDEN,), jnp.float32)
    p["Wm1"] = xavier_uniform(keys[2 * NUM_HOPS + 2], (HIDDEN, OUT_FEATS), gain)
    p["bm1"] = jnp.zeros((OUT_FEATS,), jnp.float32)
    # BatchNorm1d defaults (gamma=1, beta=0, running_mean=0, running_var=1)
    bn_scale = jnp.full((HIDDEN,), 1.0 / np.sqrt(1.0 + BN_EPS), jnp.float32)
    bn_shift = jnp.zeros((HIDDEN,), jnp.float32)
    p["bn_hop_s"] = bn_scale   # shared default values for every hop-MLP BN
    p["bn_hop_t"] = bn_shift
    p["bnf_s"] = bn_scale      # SimpleSAGN.bn
    p["bnf_t"] = bn_shift
    p["bnm_s"] = bn_scale      # BN inside self.mlp
    p["bnm_t"] = bn_shift
    # uniform hop weights
    p["hop_w"] = jnp.full((NUM_HOPS,), 1.0 / NUM_HOPS, jnp.float32)
    return p


def fold_params(p):
    """Host-side algebraic folds (eval mode):
       - hop-MLP BN into W0/b0, output-MLP BN into Wm0/bm0,
       - head-mean into W1 / b1 / Wres,
       - hop weights into W1/b1,
       - per-hop first layers -> block-diagonal W0_ext with residual columns,
       - residual identity rows + final BN affine into the (128,32) second weight,
       - all (1,X) biases packed into one (8,128) slab."""
    def heads_mean(w):   # (in, HH) -> (in, H), matches .view(-1, heads, H).mean(1)
        return np.asarray(w).reshape(w.shape[0], NUM_HEADS, HIDDEN).mean(axis=1)

    # --- first contraction: block-diag hop layers (BN folded) + residual columns ---
    w0f = np.asarray(p["W0"] * p["bn_hop_s"][None, None, :])              # (K, IN, H)
    b0f = np.asarray(p["b0"] * p["bn_hop_s"][None, :] + p["bn_hop_t"][None, :])
    W0_ext = np.zeros((KIN, CONTRACT), np.float32)                        # (48, 128)
    for i in range(NUM_HOPS):
        W0_ext[i * IN_FEATS:(i + 1) * IN_FEATS,
               i * HIDDEN:(i + 1) * HIDDEN] = w0f[i]
    W0_ext[:IN_FEATS, KH:] = heads_mean(p["Wres"])        # residual uses feats[0] (hop-0 cols)
    b0_ext = np.zeros((CONTRACT,), np.float32)
    b0_ext[:KH] = b0f.reshape(-1)                         # residual lanes have no bias

    # --- second contraction: head-mean + hop weights + residual identity + final BN ---
    w1m = np.stack([heads_mean(p["W1"][i]) for i in range(NUM_HOPS)])     # (K, H, H)
    b1m = np.asarray(p["b1"]).reshape(NUM_HOPS, NUM_HEADS, HIDDEN).mean(axis=1)
    hop_w = np.asarray(p["hop_w"])
    W1_stack = (w1m * hop_w[:, None, None]).reshape(KH, HIDDEN)
    b1_sum = (b1m * hop_w[:, None]).sum(axis=0)                           # (H,)
    W2 = np.concatenate([W1_stack, np.eye(HIDDEN, dtype=np.float32)], axis=0)  # (128, 32)
    s, t = np.asarray(p["bnf_s"]), np.asarray(p["bnf_t"])
    W2 = W2 * s[None, :]                                  # fold final BN scale (column-wise)
    b2 = b1_sum * s + t

    # --- output MLP first layer with its BN folded ---
    wm0f = np.asarray(p["Wm0"] * p["bnm_s"][None, :])
    bm0f = np.asarray(p["bm0"] * p["bnm_s"] + p["bnm_t"])
    wm1 = np.asarray(p["Wm1"])
    bm1 = np.asarray(p["bm1"])

    # --- pack all row-vector biases into one (8,128) slab ---
    bias_slab = np.zeros((8, 128), np.float32)
    bias_slab[0, :CONTRACT] = b0_ext
    bias_slab[1, :HIDDEN] = b2
    bias_slab[2, :HIDDEN] = bm0f
    bias_slab[3, :OUT_FEATS] = bm1

    return (jnp.asarray(W0_ext), jnp.asarray(W2), jnp.asarray(wm0f),
            jnp.asarray(wm1), jnp.asarray(bias_slab))


# ----------------------------- plain-JAX reference -----------------------------
def reference(feats_stacked, p):
    def bn(x, s, t):
        return x * s[None, :] + t[None, :]

    n = feats_stacked.shape[1]
    out = jnp.zeros((n, NUM_HEADS, HIDDEN), jnp.float32)
    for i in range(NUM_HOPS):
        x = feats_stacked[i]
        h = x @ p["W0"][i] + p["b0"][i][None, :]
        h = jax.nn.relu(bn(h, p["bn_hop_s"], p["bn_hop_t"]))
        h = h @ p["W1"][i] + p["b1"][i][None, :]
        out = out + p["hop_w"][i] * h.reshape(n, NUM_HEADS, HIDDEN)
    out = out + (feats_stacked[0] @ p["Wres"]).reshape(n, NUM_HEADS, HIDDEN)
    out = out.mean(axis=1)
    out = jax.nn.relu(bn(out, p["bnf_s"], p["bnf_t"]))
    out = out @ p["Wm0"] + p["bm0"][None, :]
    out = jax.nn.relu(bn(out, p["bnm_s"], p["bnm_t"]))
    out = out @ p["Wm1"] + p["bm1"][None, :]
    return out


# ----------------------------------- main -----------------------------------
if __name__ == "__main__":
    key = jax.random.PRNGKey(0)
    k_feat, k_param = jax.random.split(key)

    # feats: list of num_hops node-feature matrices, stacked [num_hops, N, in_feats]
    feats_stacked = jax.random.normal(k_feat, (NUM_HOPS, N_NODES, IN_FEATS), jnp.float32)
    # TODO(synk): label_fc path (use_labels=True) and training-mode dropout/BN are
    # not exercised; label_emb unused (eval-mode fold only).

    params = make_params(k_param)
    folded = fold_params(params)

    # Hop-major per-node feature concatenation: columns [hop0 | hop1 | hop2].
    # This ordering contract must match the block-diagonal W0_ext (residual reads
    # columns 0..15 == feats[0]).
    x_cat = jnp.transpose(feats_stacked, (1, 0, 2)).reshape(N_NODES, KIN)

    out = simple_sagn_pallas(x_cat, *folded)
    out = jax.block_until_ready(out)

    ref = reference(feats_stacked, params)
    np.testing.assert_allclose(np.asarray(out), np.asarray(ref), rtol=1e-4, atol=1e-4)

    print("KERNEL_OK")
</pallas_src>

<mosaic_0001>
module attributes {stable_mosaic.version = 11 : i64} {
  func.func @sagn_kernel(%arg0: i32, %arg1: memref<128x48xf32, #tpu.memory_space<vmem>>, %arg2: memref<48x128xf32, #tpu.memory_space<vmem>>, %arg3: memref<128x32xf32, #tpu.memory_space<vmem>>, %arg4: memref<32x32xf32, #tpu.memory_space<vmem>>, %arg5: memref<32x8xf32, #tpu.memory_space<vmem>>, %arg6: memref<8x128xf32, #tpu.memory_space<vmem>>, %arg7: memref<128x8xf32, #tpu.memory_space<vmem>>) attributes {dimension_semantics = [#tpu.dimension_semantics<parallel>], iteration_bounds = array<i64: 4>, scalar_prefetch = 0 : i64, scratch_operands = 0 : i64, tpu.core_type = #tpu.core_type<tc>, window_params = [{transform_indices = @transform_0, window_bounds = array<i64: 128, 48>}, {pipeline_mode = #tpu.pipeline_mode<synchronous>, transform_indices = @transform_1, window_bounds = array<i64: 48, 128>}, {pipeline_mode = #tpu.pipeline_mode<synchronous>, transform_indices = @transform_2, window_bounds = array<i64: 128, 32>}, {pipeline_mode = #tpu.pipeline_mode<synchronous>, transform_indices = @transform_3, window_bounds = array<i64: 32, 32>}, {pipeline_mode = #tpu.pipeline_mode<synchronous>, transform_indices = @transform_4, window_bounds = array<i64: 32, 8>}, {pipeline_mode = #tpu.pipeline_mode<synchronous>, transform_indices = @transform_5, window_bounds = array<i64: 8, 128>}, {transform_indices = @transform_6, window_bounds = array<i64: 128, 8>}]} {
    %c0 = arith.constant 0 : index
    %c0_0 = arith.constant 0 : index
    %0 = vector.load %arg1[%c0, %c0_0] : memref<128x48xf32, #tpu.memory_space<vmem>>, vector<128x48xf32>
    %c0_1 = arith.constant 0 : index
    %c0_2 = arith.constant 0 : index
    %1 = vector.load %arg2[%c0_1, %c0_2] : memref<48x128xf32, #tpu.memory_space<vmem>>, vector<48x128xf32>
    %cst = arith.constant dense<0.000000e+00> : vector<128x128xf32>
    %2 = tpu.matmul %0, %1, %cst {dimension_numbers = #tpu.dot_dimension_numbers<[1], [0], [0], [1], [0, 0, 1, 1], [], []>} : vector<128x48xf32>, vector<48x128xf32>, vector<128x128xf32> -> vector<128x128xf32>
    %c0_3 = arith.constant 0 : index
    %c0_4 = arith.constant 0 : index
    %3 = vector.load %arg6[%c0_3, %c0_4] : memref<8x128xf32, #tpu.memory_space<vmem>>, vector<1x128xf32>
    %4 = vector.broadcast %3 : vector<1x128xf32> to vector<128x128xf32>
    %5 = arith.addf %2, %4 : vector<128x128xf32>
    %6 = tpu.iota {dimensions = array<i32: 1>} : vector<128x128xi32>
    %c96_i32 = arith.constant 96 : i32
    %7 = vector.broadcast %c96_i32 : i32 to vector<128x128xi32>
    %8 = arith.cmpi slt, %6, %7 : vector<128x128xi32>
    %cst_5 = arith.constant 0.000000e+00 : f32
    %9 = vector.broadcast %cst_5 : f32 to vector<128x128xf32>
    %10 = arith.maximumf %5, %9 : vector<128x128xf32>
    %11 = arith.select %8, %10, %5 : vector<128x128xi1>, vector<128x128xf32>
    %c0_6 = arith.constant 0 : index
    %c0_7 = arith.constant 0 : index
    %12 = vector.load %arg3[%c0_6, %c0_7] : memref<128x32xf32, #tpu.memory_space<vmem>>, vector<128x32xf32>
    %cst_8 = arith.constant dense<0.000000e+00> : vector<128x32xf32>
    %13 = tpu.matmul %11, %12, %cst_8 {dimension_numbers = #tpu.dot_dimension_numbers<[1], [0], [0], [1], [0, 0, 1, 1], [], []>} : vector<128x128xf32>, vector<128x32xf32>, vector<128x32xf32> -> vector<128x32xf32>
    %c1 = arith.constant 1 : index
    %c0_9 = arith.constant 0 : index
    %14 = vector.load %arg6[%c1, %c0_9] : memref<8x128xf32, #tpu.memory_space<vmem>>, vector<1x32xf32>
    %15 = vector.broadcast %14 : vector<1x32xf32> to vector<128x32xf32>
    %16 = arith.addf %13, %15 : vector<128x32xf32>
    %cst_10 = arith.constant 0.000000e+00 : f32
    %17 = vector.broadcast %cst_10 : f32 to vector<128x32xf32>
    %18 = arith.maximumf %16, %17 : vector<128x32xf32>
    %c0_11 = arith.constant 0 : index
    %c0_12 = arith.constant 0 : index
    %19 = vector.load %arg4[%c0_11, %c0_12] : memref<32x32xf32, #tpu.memory_space<vmem>>, vector<32x32xf32>
    %cst_13 = arith.constant dense<0.000000e+00> : vector<128x32xf32>
    %20 = tpu.matmul %18, %19, %cst_13 {dimension_numbers = #tpu.dot_dimension_numbers<[1], [0], [0], [1], [0, 0, 1, 1], [], []>} : vector<128x32xf32>, vector<32x32xf32>, vector<128x32xf32> -> vector<128x32xf32>
    %c2 = arith.constant 2 : index
    %c0_14 = arith.constant 0 : index
    %21 = vector.load %arg6[%c2, %c0_14] : memref<8x128xf32, #tpu.memory_space<vmem>>, vector<1x32xf32>
    %22 = vector.broadcast %21 : vector<1x32xf32> to vector<128x32xf32>
    %23 = arith.addf %20, %22 : vector<128x32xf32>
    %cst_15 = arith.constant 0.000000e+00 : f32
    %24 = vector.broadcast %cst_15 : f32 to vector<128x32xf32>
    %25 = arith.maximumf %23, %24 : vector<128x32xf32>
    %c0_16 = arith.constant 0 : index
    %c0_17 = arith.constant 0 : index
    %26 = vector.load %arg5[%c0_16, %c0_17] : memref<32x8xf32, #tpu.memory_space<vmem>>, vector<32x8xf32>
    %cst_18 = arith.constant dense<0.000000e+00> : vector<128x8xf32>
    %27 = tpu.matmul %25, %26, %cst_18 {dimension_numbers = #tpu.dot_dimension_numbers<[1], [0], [0], [1], [0, 0, 1, 1], [], []>} : vector<128x32xf32>, vector<32x8xf32>, vector<128x8xf32> -> vector<128x8xf32>
    %c3 = arith.constant 3 : index
    %c0_19 = arith.constant 0 : index
    %28 = vector.load %arg6[%c3, %c0_19] : memref<8x128xf32, #tpu.memory_space<vmem>>, vector<1x8xf32>
    %29 = vector.broadcast %28 : vector<1x8xf32> to vector<128x8xf32>
    %30 = arith.addf %27, %29 : vector<128x8xf32>
    %c0_20 = arith.constant 0 : index
    %c0_21 = arith.constant 0 : index
    %31 = vector.load %arg7[%c0_20, %c0_21] : memref<128x8xf32, #tpu.memory_space<vmem>>, vector<128x8xf32>
    tpu.vector_store %arg7[%c0_20, %c0_21], %30 {strides = array<i32>} : memref<128x8xf32, #tpu.memory_space<vmem>>, vector<128x8xf32>,
    return
  }
  func.func @transform_0(%arg0: i32) -> (i32, i32) {
    %c0_i32 = arith.constant 0 : i32
    %c0_i32_0 = arith.constant 0 : i32
    return %arg0, %c0_i32 : i32, i32
  }
  func.func @transform_1(%arg0: i32) -> (i32, i32) {
    %c0_i32 = arith.constant 0 : i32
    %c0_i32_0 = arith.constant 0 : i32
    %c0_i32_1 = arith.constant 0 : i32
    return %c0_i32, %c0_i32_0 : i32, i32
  }
  func.func @transform_2(%arg0: i32) -> (i32, i32) {
    %c0_i32 = arith.constant 0 : i32
    %c0_i32_0 = arith.constant 0 : i32
    %c0_i32_1 = arith.constant 0 : i32
    return %c0_i32, %c0_i32_0 : i32, i32
  }
  func.func @transform_3(%arg0: i32) -> (i32, i32) {
    %c0_i32 = arith.constant 0 : i32
    %c0_i32_0 = arith.constant 0 : i32
    %c0_i32_1 = arith.constant 0 : i32
    return %c0_i32, %c0_i32_0 : i32, i32
  }
  func.func @transform_4(%arg0: i32) -> (i32, i32) {
    %c0_i32 = arith.constant 0 : i32
    %c0_i32_0 = arith.constant 0 : i32
    %c0_i32_1 = arith.constant 0 : i32
    return %c0_i32, %c0_i32_0 : i32, i32
  }
  func.func @transform_5(%arg0: i32) -> (i32, i32) {
    %c0_i32 = arith.constant 0 : i32
    %c0_i32_0 = arith.constant 0 : i32
    %c0_i32_1 = arith.constant 0 : i32
    return %c0_i32, %c0_i32_0 : i32, i32
  }
  func.func @transform_6(%arg0: i32) -> (i32, i32) {
    %c0_i32 = arith.constant 0 : i32
    %c0_i32_0 = arith.constant 0 : i32
    return %arg0, %c0_i32 : i32, i32
  }
}

</mosaic_0001>

<llo_original>
// kernel: tpu_custom_call.1
$region0: #{tpu_custom_call.1}
  #allocation0 [shape = 'u32[]', space=smem, size = 0x4, offset = 0x4, fixed_abs, tag = 'smem constant byte address 0x4 - core index']
  #allocation1 [shape = 'u32[72,128]{1,0:T(1,128)}', space=vmem, size = 0x9000, scoped, tag = 'internal scratch']
  %s0 = inlined_call_operand.vmem [shape: f32[512,48], index: 0, kind: input, shape index: {}]
  %s1 = inlined_call_operand.vmem [shape: f32[48,128], index: 1, kind: input, shape index: {}]
  %s2 = inlined_call_operand.vmem [shape: f32[128,32], index: 2, kind: input, shape index: {}]
  %s3 = inlined_call_operand.vmem [shape: f32[32,32], index: 3, kind: input, shape index: {}]
  %s4 = inlined_call_operand.vmem [shape: f32[32,8], index: 4, kind: input, shape index: {}]
  %s5 = inlined_call_operand.vmem [shape: f32[8,128], index: 5, kind: input, shape index: {}]
  %s6 = inlined_call_operand.vmem [shape: f32[512,8], index: 6, kind: output, shape index: {}]
  %s7 = sld [smem:[#allocation0]]
  $region57: #{tpu_custom_call.1} parent=0
    _
  %s9 = ssub.s32 1, %s7
  %s10 = scalar_select 0, %s9, %s7
  loop: start=0, step=1, limit=6
  $region2: #{tpu_custom_call.1} parent=0 // loop_pre_header
    _
  $region3: #{tpu_custom_call.1} parent=0 // loop_header
    %s12 = sphi 0, %s16
    %p13 = scmp.ge.s32.totalorder %s12, 6
    %s22 = sphi 0, %s24
    %s25 = sphi 0, %s22
    %s26 = sphi 0, %s25
    %s42 = sphi 0, %s26
    %s46 = sphi 0, %s46
    %s48 = sphi 0, %s46
    %s49 = sphi 0, %s48
    %s63 = sphi 0, %s49
    %s67 = sphi 0, %s67
    %s69 = sphi 0, %s67
    %s70 = sphi 0, %s69
    %s84 = sphi 0, %s70
    %s88 = sphi 0, %s88
    %s90 = sphi 0, %s88
    %s91 = sphi 0, %s90
    %s105 = sphi 0, %s91
    %s109 = sphi 0, %s109
    %s111 = sphi 0, %s109
    %s112 = sphi 0, %s111
    %s126 = sphi 0, %s112
    %s130 = sphi 0, %s130
    %s132 = sphi 0, %s130
    %s133 = sphi 0, %s132
    %s147 = sphi 0, %s133
    %s153 = sphi 0, %s155
    %s156 = sphi 0, %s153
    %s157 = sphi 0, %s156
    %s173 = sphi 0, %s157
  $region4: #{tpu_custom_call.1} parent=0 // loop_header_branch
    %15 = sbr.rel (%p13) target = $region8
  $region5: #{tpu_custom_call.1} parent=0 // loop_body
    %s17 = ssub.s32 %s12, 1
    %s18 = ssub.s32 %s12, 2
    %s19 = sadd.s32 %s12, 1
    %s20 = ssub.s32 %s12, %s19
    %p21 = scmp.eq.s32.totalorder %s20, 0
    %s23 = sadd.s32 %s22, 1
    %s24 = scalar_select %p21, %s22, %s23
    %p27 = pneg %p21
    %p28 = scmp.eq.s32.totalorder %s12, 3
    %p29 = por %p27, %p28
    %p30 = scmp.ne.s32.totalorder %s22, %s25
    %p31 = scmp.eq.s32.totalorder %s12, 0
    %p32 = por %p30, %p31
    %p33 = scmp.ne.s32.totalorder %s22, %s25
    %p34 = scmp.eq.s32.totalorder %s17, 3
    %p35 = por %p33, %p34
    %p36 = scmp.ne.s32.totalorder %s25, %s26
    %p37 = scmp.eq.s32.totalorder %s17, 0
    %p38 = por %p36, %p37
    %p39 = scmp.ne.s32.totalorder %s25, %s26
    %p40 = scmp.eq.s32.totalorder %s18, 3
    %p41 = por %p39, %p40
    %p43 = scmp.ne.s32.totalorder %s26, %s42
    %p44 = scmp.eq.s32.totalorder %s18, 0
    %p45 = por %p43, %p44
    %s47 = sadd.s32 %s46, 1
    %p50 = scmp.eq.s32.totalorder %s12, 3
    %p51 = scmp.ne.s32.totalorder %s46, %s48
    %p52 = scmp.eq.s32.totalorder %s12, 0
    %p53 = por %p51, %p52
    %p54 = scmp.ne.s32.totalorder %s46, %s48
    %p55 = scmp.eq.s32.totalorder %s17, 3
    %p56 = por %p54, %p55
    %p57 = scmp.ne.s32.totalorder %s48, %s49
    %p58 = scmp.eq.s32.totalorder %s17, 0
    %p59 = por %p57, %p58
    %p60 = scmp.ne.s32.totalorder %s48, %s49
    %p61 = scmp.eq.s32.totalorder %s18, 3
    %p62 = por %p60, %p61
    %p64 = scmp.ne.s32.totalorder %s49, %s63
    %p65 = scmp.eq.s32.totalorder %s18, 0
    %p66 = por %p64, %p65
    %s68 = sadd.s32 %s67, 1
    %p71 = scmp.eq.s32.totalorder %s12, 3
    %p72 = scmp.ne.s32.totalorder %s67, %s69
    %p73 = scmp.eq.s32.totalorder %s12, 0
    %p74 = por %p72, %p73
    %p75 = scmp.ne.s32.totalorder %s67, %s69
    %p76 = scmp.eq.s32.totalorder %s17, 3
    %p77 = por %p75, %p76
    %p78 = scmp.ne.s32.totalorder %s69, %s70
    %p79 = scmp.eq.s32.totalorder %s17, 0
    %p80 = por %p78, %p79
    %p81 = scmp.ne.s32.totalorder %s69, %s70
    %p82 = scmp.eq.s32.totalorder %s18, 3
    %p83 = por %p81, %p82
    %p85 = scmp.ne.s32.totalorder %s70, %s84
    %p86 = scmp.eq.s32.totalorder %s18, 0
    %p87 = por %p85, %p86
    %s89 = sadd.s32 %s88, 1
    %p92 = scmp.eq.s32.totalorder %s12, 3
    %p93 = scmp.ne.s32.totalorder %s88, %s90
    %p94 = scmp.eq.s32.totalorder %s12, 0
    %p95 = por %p93, %p94
    %p96 = scmp.ne.s32.totalorder %s88, %s90
    %p97 = scmp.eq.s32.totalorder %s17, 3
    %p98 = por %p96, %p97
    %p99 = scmp.ne.s32.totalorder %s90, %s91
    %p100 = scmp.eq.s32.totalorder %s17, 0
    %p101 = por %p99, %p100
    %p102 = scmp.ne.s32.totalorder %s90, %s91
    %p103 = scmp.eq.s32.totalorder %s18, 3
    %p104 = por %p102, %p103
    %p106 = scmp.ne.s32.totalorder %s91, %s105
    %p107 = scmp.eq.s32.totalorder %s18, 0
    %p108 = por %p106, %p107
    %s110 = sadd.s32 %s109, 1
    %p113 = scmp.eq.s32.totalorder %s12, 3
    %p114 = scmp.ne.s32.totalorder %s109, %s111
    %p115 = scmp.eq.s32.totalorder %s12, 0
    %p116 = por %p114, %p115
    %p117 = scmp.ne.s32.totalorder %s109, %s111
    %p118 = scmp.eq.s32.totalorder %s17, 3
    %p119 = por %p117, %p118
    %p120 = scmp.ne.s32.totalorder %s111, %s112
    %p121 = scmp.eq.s32.totalorder %s17, 0
    %p122 = por %p120, %p121
    %p123 = scmp.ne.s32.totalorder %s111, %s112
    %p124 = scmp.eq.s32.totalorder %s18, 3
    %p125 = por %p123, %p124
    %p127 = scmp.ne.s32.totalorder %s112, %s126
    %p128 = scmp.eq.s32.totalorder %s18, 0
    %p129 = por %p127, %p128
    %s131 = sadd.s32 %s130, 1
    %p134 = scmp.eq.s32.totalorder %s12, 3
    %p135 = scmp.ne.s32.totalorder %s130, %s132
    %p136 = scmp.eq.s32.totalorder %s12, 0
    %p137 = por %p135, %p136
    %p138 = scmp.ne.s32.totalorder %s130, %s132
    %p139 = scmp.eq.s32.totalorder %s17, 3
    %p140 = por %p138, %p139
    %p141 = scmp.ne.s32.totalorder %s132, %s133
    %p142 = scmp.eq.s32.totalorder %s17, 0
    %p143 = por %p141, %p142
    %p144 = scmp.ne.s32.totalorder %s132, %s133
    %p145 = scmp.eq.s32.totalorder %s18, 3
    %p146 = por %p144, %p145
    %p148 = scmp.ne.s32.totalorder %s133, %s147
    %p149 = scmp.eq.s32.totalorder %s18, 0
    %p150 = por %p148, %p149
    %s151 = ssub.s32 %s12, %s19
    %p152 = scmp.eq.s32.totalorder %s151, 0
    %s154 = sadd.s32 %s153, 1
    %s155 = scalar_select %p152, %s153, %s154
    %p158 = pneg %p152
    %p159 = scmp.eq.s32.totalorder %s12, 3
    %p160 = por %p158, %p159
    %p161 = scmp.ne.s32.totalorder %s153, %s156
    %p162 = scmp.eq.s32.totalorder %s12, 0
    %p163 = por %p161, %p162
    %p164 = scmp.ne.s32.totalorder %s153, %s156
    %p165 = scmp.eq.s32.totalorder %s17, 3
    %p166 = por %p164, %p165
    %p167 = scmp.ne.s32.totalorder %s156, %s157
    %p168 = scmp.eq.s32.totalorder %s17, 0
    %p169 = por %p167, %p168
    %p170 = scmp.ne.s32.totalorder %s156, %s157
    %p171 = scmp.eq.s32.totalorder %s18, 3
    %p172 = por %p170, %p171
    %p174 = scmp.ne.s32.totalorder %s157, %s173
    %p175 = scmp.eq.s32.totalorder %s18, 0
    %p176 = por %p174, %p175
    %p177 = scmp.le.s32.totalorder 1, %s12
    %p178 = scmp.lt.s32.totalorder %s12, 5
    %p179 = pnand %p177, %p178
    %p180 = pneg %p179
    // Predicated region
    $region9: #{tpu_custom_call.1} parent=5 // pred_check
      _
    $region10: #{tpu_custom_call.1} parent=5 // pred_check_branch
      %182 = sbr.rel (%p179) target = $region12
    $region11: #{tpu_custom_call.1} parent=5 // pred_region
      %s183 = ssub.s32 %s12, 1
      // Predicated region
      $region13: #{tpu_custom_call.1} parent=11 // pred_check
        %p184 = pneg %p59
      $region14: #{tpu_custom_call.1} parent=11 // pred_check_branch
        %186 = sbr.rel (%p184) target = $region16
      $region15: #{tpu_custom_call.1} parent=11 // pred_region
        _
      $region16: #{tpu_custom_call.1} parent=11 // pred_fallthru
        _
      // Predicated region
      $region17: #{tpu_custom_call.1} parent=11 // pred_check
        %p187 = pneg %p80
      $region18: #{tpu_custom_call.1} parent=11 // pred_check_branch
        %189 = sbr.rel (%p187) target = $region20
      $region19: #{tpu_custom_call.1} parent=11 // pred_region
        _
      $region20: #{tpu_custom_call.1} parent=11 // pred_fallthru
        _
      // Predicated region
      $region21: #{tpu_custom_call.1} parent=11 // pred_check
        %p190 = pneg %p101
      $region22: #{tpu_custom_call.1} parent=11 // pred_check_branch
        %192 = sbr.rel (%p190) target = $region24
      $region23: #{tpu_custom_call.1} parent=11 // pred_region
        _
      $region24: #{tpu_custom_call.1} parent=11 // pred_fallthru
        _
      // Predicated region
      $region25: #{tpu_custom_call.1} parent=11 // pred_check
        %p193 = pneg %p122
      $region26: #{tpu_custom_call.1} parent=11 // pred_check_branch
        %195 = sbr.rel (%p193) target = $region28
      $region27: #{tpu_custom_call.1} parent=11 // pred_region
        _
      $region28: #{tpu_custom_call.1} parent=11 // pred_fallthru
        _
      // Predicated region
      $region29: #{tpu_custom_call.1} parent=11 // pred_check
        %p196 = pneg %p143
      $region30: #{tpu_custom_call.1} parent=11 // pred_check_branch
        %198 = sbr.rel (%p196) target = $region32
      $region31: #{tpu_custom_call.1} parent=11 // pred_region
        _
      $region32: #{tpu_custom_call.1} parent=11 // pred_fallthru
        _
    $region12: #{tpu_custom_call.1} parent=5 // pred_fallthru
      _
    %p199 = scmp.lt.s32.totalorder %s12, 4
    // Predicated region
    $region33: #{tpu_custom_call.1} parent=5 // pred_check
      %p200 = pneg %p199
    $region34: #{tpu_custom_call.1} parent=5 // pred_check_branch
      %202 = sbr.rel (%p200) target = $region36
    $region35: #{tpu_custom_call.1} parent=5 // pred_region
      // Predicated region
      $region37: #{tpu_custom_call.1} parent=35 // pred_check
        %p203 = pneg %p32
      $region38: #{tpu_custom_call.1} parent=35 // pred_check_branch
        %205 = sbr.rel (%p203) target = $region40
      $region39: #{tpu_custom_call.1} parent=35 // pred_region
        %s206 = smul.u32 16, %s12
        %p207 = scmp.lt.s32.totalorder %s206, 63
        %s208 = scalar_select %p207, %s206, 63
        %s209 = smul.addr %s208, 8
        %s210 = scalar_lea.vmem %s0, %s209
        %s211 = smul.u32 16, %s12
      $region40: #{tpu_custom_call.1} parent=35 // pred_fallthru
        _
    $region36: #{tpu_custom_call.1} parent=5 // pred_fallthru
      _
    %p212 = scmp.le.s32.totalorder 1, %s12
    %p213 = scmp.lt.s32.totalorder %s12, 5
    %p214 = pnand %p212, %p213
    %p215 = pneg %p214
    // Predicated region
    $region41: #{tpu_custom_call.1} parent=5 // pred_check
      _
    $region42: #{tpu_custom_call.1} parent=5 // pred_check_branch
      %217 = sbr.rel (%p214) target = $region44
    $region43: #{tpu_custom_call.1} parent=5 // pred_region
      %s218 = ssub.s32 %s12, 1
      %s219 = smul.u32 16, %s17
      %p220 = scmp.lt.s32.totalorder %s219, 63
      %s221 = scalar_select %p220, %s219, 63
      %s222 = smul.addr %s221, 8
      %s223 = scalar_lea.vmem %s0, %s222
      %p224 = pneg %p38
      %p225 = pneg %p35
      %p226 = pneg %p59
      %p227 = pneg %p56
      %p228 = pneg %p80
      %p229 = pneg %p77
      %p230 = pneg %p101
      %p231 = pneg %p98
      %p232 = pneg %p122
      %p233 = pneg %p119
      %p234 = pneg %p143
      %p235 = pneg %p140
      %p236 = pneg %p169
      %p237 = pneg %p166
      %s238 = smul.u32 16, %s17
      %p239 = scmp.lt.s32.totalorder %s238, 63
      %s240 = scalar_select %p239, %s238, 63
      %s241 = smul.addr %s240, 8
      %s242 = scalar_lea.vmem %s6, %s241
      %s243 = smul.u32 16, %s17
      %p244 = scmp.lt.s32.totalorder %s243, 63
      %s245 = scalar_select %p244, %s243, 63
      %s246 = smul.addr %s245, 8
      %s247 = scalar_lea.vmem %s0, %s246
      %s248 = smul.u32 16, %s17
      %s249 = smul.u32 16, %s17
      %p250 = scmp.lt.s32.totalorder %s249, 63
      %s251 = scalar_select %p250, %s249, 63
      %s252 = smul.addr %s251, 8
      %s253 = scalar_lea.vmem %s6, %s252
      %s254 = smul.u32 16, %s17
      %v255 = vld [vmem:[%s247] sm:$0xff]
      %v256 = vld [vmem:[%s247 + $0x8] sm:$0xff]
      %v257 = vld [vmem:[%s247 + $0x10] sm:$0xff]
      %v258 = vld [vmem:[%s247 + $0x18] sm:$0xff]
      %v259 = vld [vmem:[%s247 + $0x20] sm:$0xff]
      %v260 = vld [vmem:[%s247 + $0x28] sm:$0xff]
      %v261 = vld [vmem:[%s247 + $0x30] sm:$0xff]
      %v262 = vld [vmem:[%s247 + $0x38] sm:$0xff]
      %v263 = vld [vmem:[%s247 + $0x40] sm:$0xff]
      %v264 = vld [vmem:[%s247 + $0x48] sm:$0xff]
      %v265 = vld [vmem:[%s247 + $0x50] sm:$0xff]
      %v266 = vld [vmem:[%s247 + $0x58] sm:$0xff]
      %v267 = vld [vmem:[%s247 + $0x60] sm:$0xff]
      %v268 = vld [vmem:[%s247 + $0x68] sm:$0xff]
      %v269 = vld [vmem:[%s247 + $0x70] sm:$0xff]
      %v270 = vld [vmem:[%s247 + $0x78] sm:$0xff]
      %v271 = vld [vmem:[%s1] sm:$0xff]
      %v272 = vld [vmem:[%s1 + $0x8] sm:$0xff]
      %v273 = vld [vmem:[%s1 + $0x10] sm:$0xff]
      %v274 = vld [vmem:[%s1 + $0x18] sm:$0xff]
      %v275 = vld [vmem:[%s1 + $0x20] sm:$0xff]
      %v276 = vld [vmem:[%s1 + $0x28] sm:$0xff]
      %v277 = vld [vmem:[%s5] sm:$0x1]
      %v278 = vperm.slane %v277, 0
      %vm279 = vcmask 392192
      %v281 = vsel %vm279, %v255, 0
      %v284 = vsel %vm279, %v256, 0
      %v287 = vsel %vm279, %v257, 0
      %v290 = vsel %vm279, %v258, 0
      %v293 = vsel %vm279, %v259, 0
      %v296 = vsel %vm279, %v260, 0
      %v299 = vsel %vm279, %v261, 0
      %v302 = vsel %vm279, %v262, 0
      %v305 = vsel %vm279, %v263, 0
      %v308 = vsel %vm279, %v264, 0
      %v311 = vsel %vm279, %v265, 0
      %v314 = vsel %vm279, %v266, 0
      %v317 = vsel %vm279, %v267, 0
      %v320 = vsel %vm279, %v268, 0
      %v323 = vsel %vm279, %v269, 0
      %v326 = vsel %vm279, %v270, 0
      %328 = vmatpush.msra.mxu0 0.0
      %329 = vmatpush.msra.mxu0 0.0
      %330 = vmatpush.msra.mxu0 0.0
      %331 = vmatpush.msra.mxu0 0.0
      %332 = vmatpush.msra.mxu0 0.0
      %333 = vmatpush.msra.mxu0 0.0
      %334 = vmatpush.msra.mxu0 0.0
      %335 = vmatpush.msra.mxu0 0.0
      %336 = vmatpush.msra.mxu0 0.0
      %337 = vmatpush.msra.mxu0 0.0
      %338 = vmatpush.msra.mxu0 %v276
      %339 = vmatpush.msra.mxu0 %v275
      %340 = vmatpush.msra.mxu0 %v274
      %341 = vmatpush.msra.mxu0 %v273
      %342 = vmatpush.msra.mxu0 %v272
      %343 = vmatpush.msra.mxu0 %v271
      %344 = vmatmul.f32.gmra.mxu0 %v281
      %v345 = vpop.f32.mrf.mxu0
      %v346 = vadd.f32 %v278, %v345
      %347 = vmatmul.f32.gmra.mxu0 %v284
      %v348 = vpop.f32.mrf.mxu0
      %v349 = vadd.f32 %v278, %v348
      %350 = vmatmul.f32.gmra.mxu0 %v287
      %v351 = vpop.f32.mrf.mxu0
      %v352 = vadd.f32 %v278, %v351
      %353 = vmatmul.f32.gmra.mxu0 %v290
      %v354 = vpop.f32.mrf.mxu0
      %v355 = vadd.f32 %v278, %v354
      %356 = vmatmul.f32.gmra.mxu0 %v293
      %v357 = vpop.f32.mrf.mxu0
      %v358 = vadd.f32 %v278, %v357
      %359 = vmatmul.f32.gmra.mxu0 %v296
      %v360 = vpop.f32.mrf.mxu0
      %v361 = vadd.f32 %v278, %v360
      %362 = vmatmul.f32.gmra.mxu0 %v299
      %v363 = vpop.f32.mrf.mxu0
      %v364 = vadd.f32 %v278, %v363
      %365 = vmatmul.f32.gmra.mxu0 %v302
      %v366 = vpop.f32.mrf.mxu0
      %v367 = vadd.f32 %v278, %v366
      %368 = vmatmul.f32.gmra.mxu0 %v305
      %v369 = vpop.f32.mrf.mxu0
      %v370 = vadd.f32 %v278, %v369
      %371 = vmatmul.f32.gmra.mxu0 %v308
      %v372 = vpop.f32.mrf.mxu0
      %v373 = vadd.f32 %v278, %v372
      %374 = vmatmul.f32.gmra.mxu0 %v311
      %v375 = vpop.f32.mrf.mxu0
      %v376 = vadd.f32 %v278, %v375
      %377 = vmatmul.f32.gmra.mxu0 %v314
      %v378 = vpop.f32.mrf.mxu0
      %v379 = vadd.f32 %v278, %v378
      %380 = vmatmul.f32.gmra.mxu0 %v317
      %v381 = vpop.f32.mrf.mxu0
      %v382 = vadd.f32 %v278, %v381
      %383 = vmatmul.f32.gmra.mxu0 %v320
      %v384 = vpop.f32.mrf.mxu0
      %v385 = vadd.f32 %v278, %v384
      %386 = vmatmul.f32.gmra.mxu0 %v323
      %v387 = vpop.f32.mrf.mxu0
      %v388 = vadd.f32 %v278, %v387
      %389 = vmatmul.f32.gmra.mxu0 %v326
      %v390 = vpop.f32.mrf.mxu0
      %v391 = vadd.f32 %v278, %v390
      %392 = vdwg.mxu0
      %v393 = vlaneseq
      %v394 = vand.u32 %v393, 127
      %vm395 = vcmp.lt.s32.totalorder %v394, 96
      %v396 = vmax.f32 %v346, 0.0
      %v397 = vmax.f32 %v349, 0.0
      %v398 = vmax.f32 %v352, 0.0
      %v399 = vmax.f32 %v355, 0.0
      %v400 = vmax.f32 %v358, 0.0
      %v401 = vmax.f32 %v361, 0.0
      %v402 = vmax.f32 %v364, 0.0
      %v403 = vmax.f32 %v367, 0.0
      %v404 = vmax.f32 %v370, 0.0
      %v405 = vmax.f32 %v373, 0.0
      %v406 = vmax.f32 %v376, 0.0
      %v407 = vmax.f32 %v379, 0.0
      %v408 = vmax.f32 %v382, 0.0
      %v409 = vmax.f32 %v385, 0.0
      %v410 = vmax.f32 %v388, 0.0
      %v411 = vmax.f32 %v391, 0.0
      %v412 = vsel %vm395, %v396, %v346
      %v413 = vsel %vm395, %v397, %v349
      %v414 = vsel %vm395, %v398, %v352
      %v415 = vsel %vm395, %v399, %v355
      %v416 = vsel %vm395, %v400, %v358
      %v417 = vsel %vm395, %v401, %v361
      %v418 = vsel %vm395, %v402, %v364
      %v419 = vsel %vm395, %v403, %v367
      %v420 = vsel %vm395, %v404, %v370
      %v421 = vsel %vm395, %v405, %v373
      %v422 = vsel %vm395, %v406, %v376
      %v423 = vsel %vm395, %v407, %v379
      %v424 = vsel %vm395, %v408, %v382
      %v425 = vsel %vm395, %v409, %v385
      %v426 = vsel %vm395, %v410, %v388
      %v427 = vsel %vm395, %v411, %v391
      %v428 = vld [vmem:[%s2] sm:$0xff]
      %v429 = vld [vmem:[%s2 + $0x8] sm:$0xff]
      %v430 = vld [vmem:[%s2 + $0x10] sm:$0xff]
      %v431 = vld [vmem:[%s2 + $0x18] sm:$0xff]
      %v432 = vld [vmem:[%s2 + $0x20] sm:$0xff]
      %v433 = vld [vmem:[%s2 + $0x28] sm:$0xff]
      %v434 = vld [vmem:[%s2 + $0x30] sm:$0xff]
      %v435 = vld [vmem:[%s2 + $0x38] sm:$0xff]
      %v436 = vld [vmem:[%s2 + $0x40] sm:$0xff]
      %v437 = vld [vmem:[%s2 + $0x48] sm:$0xff]
      %v438 = vld [vmem:[%s2 + $0x50] sm:$0xff]
      %v439 = vld [vmem:[%s2 + $0x58] sm:$0xff]
      %v440 = vld [vmem:[%s2 + $0x60] sm:$0xff]
      %v441 = vld [vmem:[%s2 + $0x68] sm:$0xff]
      %v442 = vld [vmem:[%s2 + $0x70] sm:$0xff]
      %v443 = vld [vmem:[%s2 + $0x78] sm:$0xff]
      %v444 = vld [vmem:[%s5 + $0x1] sm:$0x1]
      %v445 = vperm.slane %v444, 0
      %446 = vmatpush.msra.mxu0 %v443
      %447 = vmatpush.msra.mxu0 %v442
      %448 = vmatpush.msra.mxu0 %v441
      %449 = vmatpush.msra.mxu0 %v440
      %450 = vmatpush.msra.mxu0 %v439
      %451 = vmatpush.msra.mxu0 %v438
      %452 = vmatpush.msra.mxu0 %v437
      %453 = vmatpush.msra.mxu0 %v436
      %454 = vmatpush.msra.mxu0 %v435
      %455 = vmatpush.msra.mxu0 %v434
      %456 = vmatpush.msra.mxu0 %v433
      %457 = vmatpush.msra.mxu0 %v432
      %458 = vmatpush.msra.mxu0 %v431
      %459 = vmatpush.msra.mxu0 %v430
      %460 = vmatpush.msra.mxu0 %v429
      %461 = vmatpush.msra.mxu0 %v428
      %462 = vmatmul.f32.gmra.mxu0 %v412
      %v463 = vpop.f32.mrf.mxu0
      %v464 = vadd.f32 %v445, %v463
      %465 = vmatmul.f32.gmra.mxu0 %v413
      %v466 = vpop.f32.mrf.mxu0
      %v467 = vadd.f32 %v445, %v466
      %468 = vmatmul.f32.gmra.mxu0 %v414
      %v469 = vpop.f32.mrf.mxu0
      %v470 = vadd.f32 %v445, %v469
      %471 = vmatmul.f32.gmra.mxu0 %v415
      %v472 = vpop.f32.mrf.mxu0
      %v473 = vadd.f32 %v445, %v472
      %474 = vmatmul.f32.gmra.mxu0 %v416
      %v475 = vpop.f32.mrf.mxu0
      %v476 = vadd.f32 %v445, %v475
      %477 = vmatmul.f32.gmra.mxu0 %v417
      %v478 = vpop.f32.mrf.mxu0
      %v479 = vadd.f32 %v445, %v478
      %480 = vmatmul.f32.gmra.mxu0 %v418
      %v481 = vpop.f32.mrf.mxu0
      %v482 = vadd.f32 %v445, %v481
      %483 = vmatmul.f32.gmra.mxu0 %v419
      %v484 = vpop.f32.mrf.mxu0
      %v485 = vadd.f32 %v445, %v484
      %486 = vmatmul.f32.gmra.mxu0 %v420
      %v487 = vpop.f32.mrf.mxu0
      %v488 = vadd.f32 %v445, %v487
      %489 = vmatmul.f32.gmra.mxu0 %v421
      %v490 = vpop.f32.mrf.mxu0
      %v491 = vadd.f32 %v445, %v490
      %492 = vmatmul.f32.gmra.mxu0 %v422
      %v493 = vpop.f32.mrf.mxu0
      %v494 = vadd.f32 %v445, %v493
      %495 = vmatmul.f32.gmra.mxu0 %v423
      %v496 = vpop.f32.mrf.mxu0
      %v497 = vadd.f32 %v445, %v496
      %498 = vmatmul.f32.gmra.mxu0 %v424
      %v499 = vpop.f32.mrf.mxu0
      %v500 = vadd.f32 %v445, %v499
      %501 = vmatmul.f32.gmra.mxu0 %v425
      %v502 = vpop.f32.mrf.mxu0
      %v503 = vadd.f32 %v445, %v502
      %504 = vmatmul.f32.gmra.mxu0 %v426
      %v505 = vpop.f32.mrf.mxu0
      %v506 = vadd.f32 %v445, %v505
      %507 = vmatmul.f32.gmra.mxu0 %v427
      %v508 = vpop.f32.mrf.mxu0
      %v509 = vadd.f32 %v445, %v508
      %510 = vdwg.mxu0
      %v511 = vmax.f32 %v464, 0.0
      %v512 = vmax.f32 %v467, 0.0
      %v513 = vmax.f32 %v470, 0.0
      %v514 = vmax.f32 %v473, 0.0
      %v515 = vmax.f32 %v476, 0.0
      %v516 = vmax.f32 %v479, 0.0
      %v517 = vmax.f32 %v482, 0.0
      %v518 = vmax.f32 %v485, 0.0
      %v519 = vmax.f32 %v488, 0.0
      %v520 = vmax.f32 %v491, 0.0
      %v521 = vmax.f32 %v494, 0.0
      %v522 = vmax.f32 %v497, 0.0
      %v523 = vmax.f32 %v500, 0.0
      %v524 = vmax.f32 %v503, 0.0
      %v525 = vmax.f32 %v506, 0.0
      %v526 = vmax.f32 %v509, 0.0
      %v527 = vld [vmem:[%s3] sm:$0xff]
      %v528 = vld [vmem:[%s3 + $0x8] sm:$0xff]
      %v529 = vld [vmem:[%s3 + $0x10] sm:$0xff]
      %v530 = vld [vmem:[%s3 + $0x18] sm:$0xff]
      %v531 = vld [vmem:[%s5 + $0x2] sm:$0x1]
      %v532 = vperm.slane %v531, 0
      %vm533 = vcmask 261120
      %v535 = vsel %vm533, %v511, 0
      %v538 = vsel %vm533, %v512, 0
      %v541 = vsel %vm533, %v513, 0
      %v544 = vsel %vm533, %v514, 0
      %v547 = vsel %vm533, %v515, 0
      %v550 = vsel %vm533, %v516, 0
      %v553 = vsel %vm533, %v517, 0
      %v556 = vsel %vm533, %v518, 0
      %v559 = vsel %vm533, %v519, 0
      %v562 = vsel %vm533, %v520, 0
      %v565 = vsel %vm533, %v521, 0
      %v568 = vsel %vm533, %v522, 0
      %v571 = vsel %vm533, %v523, 0
      %v574 = vsel %vm533, %v524, 0
      %v577 = vsel %vm533, %v525, 0
      %v580 = vsel %vm533, %v526, 0
      %582 = vmatpush.msra.mxu0 0.0
      %583 = vmatpush.msra.mxu0 0.0
      %584 = vmatpush.msra.mxu0 0.0
      %585 = vmatpush.msra.mxu0 0.0
      %586 = vmatpush.msra.mxu0 0.0
      %587 = vmatpush.msra.mxu0 0.0
      %588 = vmatpush.msra.mxu0 0.0
      %589 = vmatpush.msra.mxu0 0.0
      %590 = vmatpush.msra.mxu0 0.0
      %591 = vmatpush.msra.mxu0 0.0
      %592 = vmatpush.msra.mxu0 0.0
      %593 = vmatpush.msra.mxu0 0.0
      %594 = vmatpush.msra.mxu0 %v530
      %595 = vmatpush.msra.mxu0 %v529
      %596 = vmatpush.msra.mxu0 %v528
      %597 = vmatpush.msra.mxu0 %v527
      %598 = vmatmul.f32.gmra.mxu0 %v535
      %v599 = vpop.f32.mrf.mxu0
      %v600 = vadd.f32 %v532, %v599
      %601 = vmatmul.f32.gmra.mxu0 %v538
      %v602 = vpop.f32.mrf.mxu0
      %v603 = vadd.f32 %v532, %v602
      %604 = vmatmul.f32.gmra.mxu0 %v541
      %v605 = vpop.f32.mrf.mxu0
      %v606 = vadd.f32 %v532, %v605
      %607 = vmatmul.f32.gmra.mxu0 %v544
      %v608 = vpop.f32.mrf.mxu0
      %v609 = vadd.f32 %v532, %v608
      %610 = vmatmul.f32.gmra.mxu0 %v547
      %v611 = vpop.f32.mrf.mxu0
      %v612 = vadd.f32 %v532, %v611
      %613 = vmatmul.f32.gmra.mxu0 %v550
      %v614 = vpop.f32.mrf.mxu0
      %v615 = vadd.f32 %v532, %v614
      %616 = vmatmul.f32.gmra.mxu0 %v553
      %v617 = vpop.f32.mrf.mxu0
      %v618 = vadd.f32 %v532, %v617
      %619 = vmatmul.f32.gmra.mxu0 %v556
      %v620 = vpop.f32.mrf.mxu0
      %v621 = vadd.f32 %v532, %v620
      %622 = vmatmul.f32.gmra.mxu0 %v559
      %v623 = vpop.f32.mrf.mxu0
      %v624 = vadd.f32 %v532, %v623
      %625 = vmatmul.f32.gmra.mxu0 %v562
      %v626 = vpop.f32.mrf.mxu0
      %v627 = vadd.f32 %v532, %v626
      %628 = vmatmul.f32.gmra.mxu0 %v565
      %v629 = vpop.f32.mrf.mxu0
      %v630 = vadd.f32 %v532, %v629
      %631 = vmatmul.f32.gmra.mxu0 %v568
      %v632 = vpop.f32.mrf.mxu0
      %v633 = vadd.f32 %v532, %v632
      %634 = vmatmul.f32.gmra.mxu0 %v571
      %v635 = vpop.f32.mrf.mxu0
      %v636 = vadd.f32 %v532, %v635
      %637 = vmatmul.f32.gmra.mxu0 %v574
      %v638 = vpop.f32.mrf.mxu0
      %v639 = vadd.f32 %v532, %v638
      %640 = vmatmul.f32.gmra.mxu0 %v577
      %v641 = vpop.f32.mrf.mxu0
      %v642 = vadd.f32 %v532, %v641
      %643 = vmatmul.f32.gmra.mxu0 %v580
      %v644 = vpop.f32.mrf.mxu0
      %v645 = vadd.f32 %v532, %v644
      %646 = vdwg.mxu0
      %v647 = vmax.f32 %v600, 0.0
      %v648 = vmax.f32 %v603, 0.0
      %v649 = vmax.f32 %v606, 0.0
      %v650 = vmax.f32 %v609, 0.0
      %v651 = vmax.f32 %v612, 0.0
      %v652 = vmax.f32 %v615, 0.0
      %v653 = vmax.f32 %v618, 0.0
      %v654 = vmax.f32 %v621, 0.0
      %v655 = vmax.f32 %v624, 0.0
      %v656 = vmax.f32 %v627, 0.0
      %v657 = vmax.f32 %v630, 0.0
      %v658 = vmax.f32 %v633, 0.0
      %v659 = vmax.f32 %v636, 0.0
      %v660 = vmax.f32 %v639, 0.0
      %v661 = vmax.f32 %v642, 0.0
      %v662 = vmax.f32 %v645, 0.0
      %v663 = vld [vmem:[%s4] sm:$0xff]
      %v664 = vld [vmem:[%s4 + $0x8] sm:$0xff]
      %v665 = vld [vmem:[%s4 + $0x10] sm:$0xff]
      %v666 = vld [vmem:[%s4 + $0x18] sm:$0xff]
      %v667 = vld [vmem:[%s5 + $0x3] sm:$0x1]
      %v668 = vperm.slane %v667, 0
      %v670 = vsel %vm533, %v647, 0
      %v673 = vsel %vm533, %v648, 0
      %v676 = vsel %vm533, %v649, 0
      %v679 = vsel %vm533, %v650, 0
      %v682 = vsel %vm533, %v651, 0
      %v685 = vsel %vm533, %v652, 0
      %v688 = vsel %vm533, %v653, 0
      %v691 = vsel %vm533, %v654, 0
      %v694 = vsel %vm533, %v655, 0
      %v697 = vsel %vm533, %v656, 0
      %v700 = vsel %vm533, %v657, 0
      %v703 = vsel %vm533, %v658, 0
      %v706 = vsel %vm533, %v659, 0
      %v709 = vsel %vm533, %v660, 0
      %v712 = vsel %vm533, %v661, 0
      %v715 = vsel %vm533, %v662, 0
      %717 = vmatpush.msra.mxu0 0.0
      %718 = vmatpush.msra.mxu0 0.0
      %719 = vmatpush.msra.mxu0 0.0
      %720 = vmatpush.msra.mxu0 0.0
      %721 = vmatpush.msra.mxu0 0.0
      %722 = vmatpush.msra.mxu0 0.0
      %723 = vmatpush.msra.mxu0 0.0
      %724 = vmatpush.msra.mxu0 0.0
      %725 = vmatpush.msra.mxu0 0.0
      %726 = vmatpush.msra.mxu0 0.0
      %727 = vmatpush.msra.mxu0 0.0
      %728 = vmatpush.msra.mxu0 0.0
      %729 = vmatpush.msra.mxu0 %v666
      %730 = vmatpush.msra.mxu0 %v665
      %731 = vmatpush.msra.mxu0 %v664
      %732 = vmatpush.msra.mxu0 %v663
      %733 = vmatmul.f32.gmra.mxu0 %v670
      %v734 = vpop.f32.mrf.mxu0
      %v735 = vadd.f32 %v668, %v734
      %736 = vmatmul.f32.gmra.mxu0 %v673
      %v737 = vpop.f32.mrf.mxu0
      %v738 = vadd.f32 %v668, %v737
      %739 = vmatmul.f32.gmra.mxu0 %v676
      %v740 = vpop.f32.mrf.mxu0
      %v741 = vadd.f32 %v668, %v740
      %742 = vmatmul.f32.gmra.mxu0 %v679
      %v743 = vpop.f32.mrf.mxu0
      %v744 = vadd.f32 %v668, %v743
      %745 = vmatmul.f32.gmra.mxu0 %v682
      %v746 = vpop.f32.mrf.mxu0
      %v747 = vadd.f32 %v668, %v746
      %748 = vmatmul.f32.gmra.mxu0 %v685
      %v749 = vpop.f32.mrf.mxu0
      %v750 = vadd.f32 %v668, %v749
      %751 = vmatmul.f32.gmra.mxu0 %v688
      %v752 = vpop.f32.mrf.mxu0
      %v753 = vadd.f32 %v668, %v752
      %754 = vmatmul.f32.gmra.mxu0 %v691
      %v755 = vpop.f32.mrf.mxu0
      %v756 = vadd.f32 %v668, %v755
      %757 = vmatmul.f32.gmra.mxu0 %v694
      %v758 = vpop.f32.mrf.mxu0
      %v759 = vadd.f32 %v668, %v758
      %760 = vmatmul.f32.gmra.mxu0 %v697
      %v761 = vpop.f32.mrf.mxu0
      %v762 = vadd.f32 %v668, %v761
      %763 = vmatmul.f32.gmra.mxu0 %v700
      %v764 = vpop.f32.mrf.mxu0
      %v765 = vadd.f32 %v668, %v764
      %766 = vmatmul.f32.gmra.mxu0 %v703
      %v767 = vpop.f32.mrf.mxu0
      %v768 = vadd.f32 %v668, %v767
      %769 = vmatmul.f32.gmra.mxu0 %v706
      %v770 = vpop.f32.mrf.mxu0
      %v771 = vadd.f32 %v668, %v770
      %772 = vmatmul.f32.gmra.mxu0 %v709
      %v773 = vpop.f32.mrf.mxu0
      %v774 = vadd.f32 %v668, %v773
      %775 = vmatmul.f32.gmra.mxu0 %v712
      %v776 = vpop.f32.mrf.mxu0
      %v777 = vadd.f32 %v668, %v776
      %778 = vmatmul.f32.gmra.mxu0 %v715
      %v779 = vpop.f32.mrf.mxu0
      %v780 = vadd.f32 %v668, %v779
      %781 = vdwg.mxu0
      %vm782 = vcmask 64512
      %783 = vst.msk [vmem:[%s253] sm:$0xff] %vm782, %v735
      %784 = vst.msk [vmem:[%s253 + $0x8] sm:$0xff] %vm782, %v738
      %785 = vst.msk [vmem:[%s253 + $0x10] sm:$0xff] %vm782, %v741
      %786 = vst.msk [vmem:[%s253 + $0x18] sm:$0xff] %vm782, %v744
      %787 = vst.msk [vmem:[%s253 + $0x20] sm:$0xff] %vm782, %v747
      %788 = vst.msk [vmem:[%s253 + $0x28] sm:$0xff] %vm782, %v750
      %789 = vst.msk [vmem:[%s253 + $0x30] sm:$0xff] %vm782, %v753
      %790 = vst.msk [vmem:[%s253 + $0x38] sm:$0xff] %vm782, %v756
      %791 = vst.msk [vmem:[%s253 + $0x40] sm:$0xff] %vm782, %v759
      %792 = vst.msk [vmem:[%s253 + $0x48] sm:$0xff] %vm782, %v762
      %793 = vst.msk [vmem:[%s253 + $0x50] sm:$0xff] %vm782, %v765
      %794 = vst.msk [vmem:[%s253 + $0x58] sm:$0xff] %vm782, %v768
      %795 = vst.msk [vmem:[%s253 + $0x60] sm:$0xff] %vm782, %v771
      %796 = vst.msk [vmem:[%s253 + $0x68] sm:$0xff] %vm782, %v774
      %797 = vst.msk [vmem:[%s253 + $0x70] sm:$0xff] %vm782, %v777
      %798 = vst.msk [vmem:[%s253 + $0x78] sm:$0xff] %vm782, %v780
      %s799 = smul.u32 16, %s17
      %p800 = scmp.lt.s32.totalorder %s799, 63
      %s801 = scalar_select %p800, %s799, 63
      %s802 = smul.addr %s801, 8
      %s803 = scalar_lea.vmem %s6, %s802
      // Predicated region
      $region45: #{tpu_custom_call.1} parent=43 // pred_check
        %p804 = pneg %p166
      $region46: #{tpu_custom_call.1} parent=43 // pred_check_branch
        %806 = sbr.rel (%p804) target = $region48
      $region47: #{tpu_custom_call.1} parent=43 // pred_region
        %s807 = smul.u32 16, %s17
      $region48: #{tpu_custom_call.1} parent=43 // pred_fallthru
        _
    $region44: #{tpu_custom_call.1} parent=5 // pred_fallthru
      _
    %p808 = scmp.le.s32.totalorder 2, %s12
    // Predicated region
    $region49: #{tpu_custom_call.1} parent=5 // pred_check
      %p809 = pneg %p808
    $region50: #{tpu_custom_call.1} parent=5 // pred_check_branch
      %811 = sbr.rel (%p809) target = $region52
    $region51: #{tpu_custom_call.1} parent=5 // pred_region
      %s812 = ssub.s32 %s12, 2
      // Predicated region
      $region53: #{tpu_custom_call.1} parent=51 // pred_check
        %p813 = pneg %p172
      $region54: #{tpu_custom_call.1} parent=51 // pred_check_branch
        %815 = sbr.rel (%p813) target = $region56
      $region55: #{tpu_custom_call.1} parent=51 // pred_region
        %s816 = smul.u32 16, %s18
        %p817 = scmp.lt.s32.totalorder %s816, 63
        %s818 = scalar_select %p817, %s816, 63
        %s819 = smul.addr %s818, 8
        %s820 = scalar_lea.vmem %s6, %s819
      $region56: #{tpu_custom_call.1} parent=51 // pred_fallthru
        _
    $region52: #{tpu_custom_call.1} parent=5 // pred_fallthru
      _
  $region6: #{tpu_custom_call.1} parent=0 // loop_footer
    %s16 = sadd.s32 1, %s12
  $region7: #{tpu_custom_call.1} parent=0 // loop_footer_branch
    %11 = sbr.rel target = $region3
  $region8: #{tpu_custom_call.1} parent=0 // loop_exit
    _

</llo_original>
